<compile_context>
chip_gen: v5e
topology: v5e:2x2
jax: 0.10.0
libtpu: 0.0.40
codegen_flags: <defaults>
</compile_context>

<pallas_src>
import functools

import jax
import jax.numpy as jnp
from jax.experimental import pallas as pl
from jax.experimental.pallas import tpu as pltpu


def _round_up(a, m):
    return -(-a // m) * m


def _tpu_budget():
    """Returns (vmem_budget, num_tensorcores, vmem_capacity).

    Hardware query used only as a tile-sizing heuristic; the fallback never
    hides kernel/compile errors (it just picks conservative v7x numbers).
    """
    vmem_cap = 64 * 1024 * 1024                       # conservative default (v7x)
    try:
        info = pltpu.get_tpu_info()
        vmem_cap = int(getattr(info, "vmem_capacity_bytes", vmem_cap))
    except Exception:
        pass
    num_tc = 2 if vmem_cap <= 64 * 1024 * 1024 else 1  # only v7x (64 MiB/TC) is dual-TC
    budget = int(vmem_cap * 0.80)                      # ~102 MiB v5e/v6e, ~51 MiB v7x
    return budget, num_tc, vmem_cap


def _sublayer_connection_kernel(seed_ref, x_ref, w_ref, b_ref, o_ref, *,
                                eps, dropout_p, training, grid_n):
    """One (out-column-tile, row-tile) step:
       LayerNorm (affine folded into W'/b') -> Linear (bf16 MXU, f32 acc)
       -> inverted dropout -> residual add."""
    x = x_ref[...].astype(jnp.float32)                 # (tm, H), full hidden dim
    h = x.shape[-1]
    tn = o_ref.shape[-1]

    # torch semantics: unbiased std (H - 1), eps added to std (not variance).
    mean = jnp.mean(x, axis=-1, keepdims=True)
    diff = x - mean
    var_unbiased = jnp.sum(diff * diff, axis=-1, keepdims=True) * (1.0 / (h - 1))
    inv_std = pl.reciprocal(jnp.sqrt(var_unbiased) + eps)   # exact; EUP slot
    normed = (diff * inv_std).astype(jnp.bfloat16)          # gamma/beta already folded

    # Sublayer Linear on the MXU: bf16 operands, f32 accumulation.
    y = jnp.dot(normed, w_ref[...], preferred_element_type=jnp.float32) + b_ref[...]

    # Inverted dropout (training only; eval mode is identity like nn.Dropout).
    if training and dropout_p > 0.0:
        tile_id = pl.program_id(0) * pl.num_programs(1) + pl.program_id(1)
        pltpu.prng_seed(seed_ref[0] + tile_id)   # seed pre-strided per sublayer
        bits = pltpu.bitcast(pltpu.prng_random_bits(y.shape), jnp.uint32)
        threshold = jnp.uint32(min(int(dropout_p * 4294967296.0), 4294967295))
        y = jnp.where(bits >= threshold, y * (1.0 / (1.0 - dropout_p)), 0.0)

    # Residual add for this output-column tile.
    if grid_n == 1:
        x_res = x
    else:
        col0 = pl.multiple_of(pl.program_id(0) * tn, tn)
        x_res = x_ref[:, pl.ds(col0, tn)].astype(jnp.float32)
    o_ref[...] = (x_res + y).astype(o_ref.dtype)


def sublayer_connection(x, w_folded, b_folded, *, eps=1e-6, dropout_p=0.1,
                        training=False, seed=0, sublayer_idx=0,
                        tile_rows=256, out_dtype=None):
    """x: (B, S, H) -> x + dropout(Linear(LayerNorm(x))) in out_dtype.

    w_folded: (H, H) bf16 with gamma pre-folded;
    b_folded: (H,) f32 with beta @ W + b pre-folded (prepare_sublayer_params).
    """
    B, S, H = x.shape
    rows = B * S
    out_dtype = jnp.dtype(x.dtype if out_dtype is None else out_dtype)
    x_item = jnp.dtype(x.dtype).itemsize
    out_item = out_dtype.itemsize

    budget, num_tc, vmem_cap = _tpu_budget()

    # Row tile: prefer 256-row tiles (fills the 256-wide MXU on v6e/v7x); split
    # rows across TensorCores only on dual-TC chips (v7x).
    tm = min(int(tile_rows), _round_up(-(-rows // num_tc), 8))
    tm = max(8, _round_up(tm, 8))

    def vmem_need(tm_, tn_):
        # Double-buffered pipeline buffers + in-kernel live temporaries.
        return (2 * tm_ * H * x_item           # x tiles
                + 2 * tm_ * tn_ * out_item     # out tiles
                + 2 * H * tn_ * 2              # bf16 weight slabs
                + 2 * tn_ * 4                  # bias
                + tm_ * H * (4 + 4 + 2)        # x_f32, diff, normed(bf16) temps
                + tm_ * tn_ * 4)               # y accumulator

    # N (output-column) tile: full H when it fits the generation-aware VMEM
    # budget (grid_n == 1 -> no LayerNorm recompute, no residual re-slice);
    # otherwise the largest 128-multiple divisor of H that fits.  Shrink tn
    # BEFORE tm: the weight slab, not the row tile, dominates the footprint.
    tn = H
    if vmem_need(tm, tn) > budget and H % 128 == 0 and H > 128:
        tn = 128
        for cand in range(H - 128, 127, -128):
            if H % cand == 0 and vmem_need(tm, cand) <= budget:
                tn = cand
                break
    while vmem_need(tm, tn) > budget and tm > 8:
        tm = max(8, _round_up(tm // 2, 8))

    padded_rows = _round_up(rows, tm)
    grid_m = padded_rows // tm
    grid_n = H // tn
    n_tiles = grid_m * grid_n

    need = vmem_need(tm, tn)
    vmem_limit = int(min(max(need + need // 4, 32 * 1024 * 1024),
                         int(vmem_cap * 0.90)))

    # ---- operand prep (weight cast / affine fold already hoisted) -----------
    x2 = x.reshape(rows, H)
    if padded_rows != rows:
        x2 = jnp.pad(x2, ((0, padded_rows - rows), (0, 0)))
    b2 = b_folded.reshape(1, H).astype(jnp.float32)
    # Distinct PRNG stream per (sublayer, tile): stride the per-sublayer seed
    # by the tile count so streams never collide across sublayers.
    seed_arr = jnp.array([int(seed) + int(sublayer_idx) * n_tiles], dtype=jnp.int32)

    kernel = functools.partial(_sublayer_connection_kernel, eps=eps,
                               dropout_p=dropout_p, training=training,
                               grid_n=grid_n)

    # Grid order (grid_n, grid_m): the weight-column axis is OUTERMOST, so each
    # (H, tn) weight slab is fetched from HBM exactly once (Pallas skips the
    # DMA when the block index is unchanged between consecutive steps) and all
    # row tiles stream past it; the cheaper x operand is re-streamed instead.
    out = pl.pallas_call(
        kernel,
        out_shape=jax.ShapeDtypeStruct((padded_rows, H), out_dtype),
        grid_spec=pltpu.PrefetchScalarGridSpec(
            num_scalar_prefetch=1,
            grid=(grid_n, grid_m),
            in_specs=[
                pl.BlockSpec((tm, H), lambda j, i, s: (i, 0)),   # x row tile (fast axis)
                pl.BlockSpec((H, tn), lambda j, i, s: (0, j)),   # W' (resident per j)
                pl.BlockSpec((1, tn), lambda j, i, s: (0, j)),   # b'
            ],
            out_specs=pl.BlockSpec((tm, tn), lambda j, i, s: (i, j)),
        ),
        compiler_params=pltpu.CompilerParams(
            dimension_semantics=("parallel", "parallel"),
            vmem_limit_bytes=vmem_limit,
        ),
    )(seed_arr, x2, w_folded, b2)

    if padded_rows != rows:
        out = out[:rows]
    return out.reshape(B, S, H)


def prepare_sublayer_params(gamma, beta, w, b):
    """One-time prep (hoisted out of the forward path).

    Folds the LayerNorm affine into the Linear and casts the weight to bf16
    once:  (gamma*n + beta) @ W + b  ==  n @ (gamma[:,None]*W) + (beta@W + b).
    """
    w32 = w.astype(jnp.float32)
    w_folded = (gamma.astype(jnp.float32)[:, None] * w32).astype(jnp.bfloat16)
    b_folded = beta.astype(jnp.float32) @ w32 + b.astype(jnp.float32)
    return w_folded, b_folded


def decoder_layer(x, prepared_params, tgt_mask=None, *, eps=1e-6, dropout_p=0.1,
                  training=False, seed=0, intermediate_dtype=jnp.bfloat16, **kw):
    """DecoderLayer.forward: three SublayerConnections applied in sequence.

    prepared_params: list of 3 (w_folded, b_folded) from prepare_sublayer_params
    (each SublayerConnection owns its LayerNorm, folded into its Linear).
    self_attn / feed_forward are constructor-injected callables in the PyTorch
    spec; here each is a deterministic Linear(H, H) stand-in, so tgt_mask is
    unused.  Intermediate activations are carried in bf16 to halve the HBM
    round-trip between sublayers; the residual is accumulated in f32 in-kernel.
    """
    # TODO(synk): replace the Linear stand-in with a real fused attention / FFN
    #             kernel (consuming tgt_mask) once concrete modules are given.
    # TODO(synk): optionally fuse all three sublayers into one pallas_call to
    #             keep the row tile resident and skip 2 activation round-trips.
    del tgt_mask
    n = len(prepared_params)
    final_dtype = x.dtype
    for idx, (w_folded, b_folded) in enumerate(prepared_params):
        od = final_dtype if idx == n - 1 else intermediate_dtype
        x = sublayer_connection(x, w_folded, b_folded, eps=eps,
                                dropout_p=dropout_p, training=training,
                                seed=seed, sublayer_idx=idx, out_dtype=od, **kw)
    return x


def _reference_decoder_layer(x, raw_params, *, eps=1e-6,
                             intermediate_dtype=jnp.bfloat16):
    """Pure-JAX reference (eval mode) mirroring the kernel's bf16 MXU operands
    and bf16 intermediate activations."""
    final_dtype = x.dtype
    n = len(raw_params)
    for idx, (gamma, beta, w, b) in enumerate(raw_params):
        xf = x.astype(jnp.float32)
        mean = jnp.mean(xf, axis=-1, keepdims=True)
        diff = xf - mean
        std = jnp.sqrt(jnp.sum(diff * diff, axis=-1, keepdims=True)
                       / (xf.shape[-1] - 1))
        normed = gamma * diff / (std + eps) + beta
        y = jnp.dot(normed.astype(jnp.bfloat16), w.astype(jnp.bfloat16),
                    preferred_element_type=jnp.float32) + b
        x = (xf + y).astype(final_dtype if idx == n - 1 else intermediate_dtype)
    return x


if __name__ == "__main__":
    B, S, H = 2, 8, 32          # small shapes consistent with the module
    key = jax.random.PRNGKey(0)
    kx, kp = jax.random.split(key)

    x = jax.random.normal(kx, (B, S, H), dtype=jnp.float32)
    tgt_mask = jnp.tril(jnp.ones((S, S), dtype=jnp.float32))  # unused by stand-ins

    # Deterministic parameter init for the three SublayerConnections.
    raw_params = []
    for _ in range(3):
        kp, k_w, k_b = jax.random.split(kp, 3)
        gamma = jnp.ones((H,), dtype=jnp.float32)     # LayerNorm a_2
        beta = jnp.zeros((H,), dtype=jnp.float32)     # LayerNorm b_2
        w = jax.random.normal(k_w, (H, H), dtype=jnp.float32) / jnp.sqrt(H)
        b = jax.random.normal(k_b, (H,), dtype=jnp.float32) * 0.01
        raw_params.append((gamma, beta, w, b))

    # One-time parameter prep (weight cast + affine fold), hoisted out of the
    # forward path so it does not add HBM traffic per call.
    prepared = [prepare_sublayer_params(*p) for p in raw_params]

    out = decoder_layer(x, prepared, tgt_mask, eps=1e-6, dropout_p=0.1,
                        training=False, seed=0)
    out = jax.block_until_ready(out)

    ref = _reference_decoder_layer(x, raw_params, eps=1e-6)
    assert out.shape == (B, S, H)
    assert out.dtype == x.dtype
    # bf16 MXU operands + bf16 intermediates (mirrored in the reference).
    assert jnp.allclose(out, ref, atol=3e-2, rtol=3e-2), "mismatch vs reference"

    print("KERNEL_OK")
</pallas_src>

<mosaic_0001>
module attributes {stable_mosaic.version = 11 : i64} {
  func.func @_sublayer_connection_kernel(%arg0: i32, %arg1: i32, %arg2: memref<1xi32, #tpu.memory_space<smem>>, %arg3: memref<8x32xf32, #tpu.memory_space<vmem>>, %arg4: memref<32x32xbf16, #tpu.memory_space<vmem>>, %arg5: memref<1x32xf32, #tpu.memory_space<vmem>>, %arg6: memref<8x32xbf16, #tpu.memory_space<vmem>>) attributes {dimension_semantics = [#tpu.dimension_semantics<parallel>, #tpu.dimension_semantics<parallel>], iteration_bounds = array<i64: 1, 2>, scalar_prefetch = 1 : i64, scratch_operands = 0 : i64, tpu.core_type = #tpu.core_type<tc>, window_params = [{transform_indices = @transform_0, window_bounds = array<i64: 8, 32>}, {transform_indices = @transform_1, window_bounds = array<i64: 32, 32>}, {transform_indices = @transform_2, window_bounds = array<i64: 1, 32>}, {transform_indices = @transform_3, window_bounds = array<i64: 8, 32>}]} {
    %c0 = arith.constant 0 : index
    %c0_0 = arith.constant 0 : index
    %0 = vector.load %arg3[%c0, %c0_0] : memref<8x32xf32, #tpu.memory_space<vmem>>, vector<8x32xf32>
    %cst = arith.constant dense<0.000000e+00> : vector<8xf32>
    %1 = vector.multi_reduction <add>, %0, %cst [1] : vector<8x32xf32> to vector<8xf32>
    %2 = vector.shape_cast %1 : vector<8xf32> to vector<8x1xf32>
    %cst_1 = arith.constant 3.200000e+01 : f32
    %3 = vector.broadcast %cst_1 : f32 to vector<8x1xf32>
    %4 = arith.divf %2, %3 : vector<8x1xf32>
    %5 = vector.broadcast %4 : vector<8x1xf32> to vector<8x32xf32>
    %6 = arith.subf %0, %5 : vector<8x32xf32>
    %7 = arith.mulf %6, %6 : vector<8x32xf32>
    %cst_2 = arith.constant dense<0.000000e+00> : vector<8xf32>
    %8 = vector.multi_reduction <add>, %7, %cst_2 [1] : vector<8x32xf32> to vector<8xf32>
    %9 = vector.shape_cast %8 : vector<8xf32> to vector<8x1xf32>
    %cst_3 = arith.constant 0.0322580636 : f32
    %10 = vector.broadcast %cst_3 : f32 to vector<8x1xf32>
    %11 = arith.mulf %9, %10 : vector<8x1xf32>
    %12 = math.sqrt %11 : vector<8x1xf32>
    %cst_4 = arith.constant 9.99999997E-7 : f32
    %13 = vector.broadcast %cst_4 : f32 to vector<8x1xf32>
    %14 = arith.addf %12, %13 : vector<8x1xf32>
    %15 = tpu.reciprocal %14 : vector<8x1xf32> -> vector<8x1xf32>
    %16 = vector.broadcast %15 : vector<8x1xf32> to vector<8x32xf32>
    %17 = arith.mulf %6, %16 : vector<8x32xf32>
    %18 = arith.truncf %17 : vector<8x32xf32> to vector<8x32xbf16>
    %c0_5 = arith.constant 0 : index
    %c0_6 = arith.constant 0 : index
    %19 = vector.load %arg4[%c0_5, %c0_6] : memref<32x32xbf16, #tpu.memory_space<vmem>>, vector<32x32xbf16>
    %cst_7 = arith.constant dense<0.000000e+00> : vector<8x32xf32>
    %20 = tpu.matmul %18, %19, %cst_7 {dimension_numbers = #tpu.dot_dimension_numbers<[1], [0], [0], [1], [0, 0, 1, 1], [], []>} : vector<8x32xbf16>, vector<32x32xbf16>, vector<8x32xf32> -> vector<8x32xf32>
    %c0_8 = arith.constant 0 : index
    %c0_9 = arith.constant 0 : index
    %21 = vector.load %arg5[%c0_8, %c0_9] : memref<1x32xf32, #tpu.memory_space<vmem>>, vector<1x32xf32>
    %22 = vector.broadcast %21 : vector<1x32xf32> to vector<8x32xf32>
    %23 = arith.addf %20, %22 : vector<8x32xf32>
    %24 = arith.addf %0, %23 : vector<8x32xf32>
    %25 = arith.truncf %24 : vector<8x32xf32> to vector<8x32xbf16>
    %c0_10 = arith.constant 0 : index
    %c0_11 = arith.constant 0 : index
    %26 = vector.load %arg6[%c0_10, %c0_11] : memref<8x32xbf16, #tpu.memory_space<vmem>>, vector<8x32xbf16>
    tpu.vector_store %arg6[%c0_10, %c0_11], %25 {strides = array<i32>} : memref<8x32xbf16, #tpu.memory_space<vmem>>, vector<8x32xbf16>,
    return
  }
  func.func @transform_0(%arg0: i32, %arg1: i32, %arg2: memref<1xi32, #tpu.memory_space<smem>>) -> (i32, i32) {
    %c0_i32 = arith.constant 0 : i32
    %c0_i32_0 = arith.constant 0 : i32
    return %arg1, %c0_i32 : i32, i32
  }
  func.func @transform_1(%arg0: i32, %arg1: i32, %arg2: memref<1xi32, #tpu.memory_space<smem>>) -> (i32, i32) {
    %c0_i32 = arith.constant 0 : i32
    %c0_i32_0 = arith.constant 0 : i32
    return %c0_i32, %arg0 : i32, i32
  }
  func.func @transform_2(%arg0: i32, %arg1: i32, %arg2: memref<1xi32, #tpu.memory_space<smem>>) -> (i32, i32) {
    %c0_i32 = arith.constant 0 : i32
    %c0_i32_0 = arith.constant 0 : i32
    return %c0_i32, %arg0 : i32, i32
  }
  func.func @transform_3(%arg0: i32, %arg1: i32, %arg2: memref<1xi32, #tpu.memory_space<smem>>) -> (i32, i32) {
    %c0_i32 = arith.constant 0 : i32
    return %arg1, %arg0 : i32, i32
  }
}

</mosaic_0001>

<llo_original>
// kernel: tpu_custom_call.1
$region0: #{tpu_custom_call.1}
  #allocation0 [shape = 'u32[]', space=smem, size = 0x4, offset = 0x4, fixed_abs, tag = 'smem constant byte address 0x4 - core index']
  #allocation1 [shape = 'u32[72,128]{1,0:T(1,128)}', space=vmem, size = 0x9000, scoped, tag = 'internal scratch']
  #allocation2 [shape = 's32[1]{0}', space=sflag, size = 0x4, scoped, tag = 'scoped memory for tpu_custom_call.1']
  #allocation3 [shape = 's32[1]{0:T(128)S(6)}', space=smem, size = 0x200, scoped, tag = 'prefetched SMEM operand 0']
  %s0 = inlined_call_operand.<no memory space> [shape: s32[1], index: 0, kind: input, shape index: {}]
  %s1 = inlined_call_operand.hbm [shape: f32[16,32], index: 1, kind: input, shape index: {}]
  %s2 = inlined_call_operand.hbm [shape: bf16[32,32], index: 2, kind: input, shape index: {}]
  %s3 = inlined_call_operand.vmem [shape: f32[1,32], index: 3, kind: input, shape index: {}]
  %s4 = inlined_call_operand.hbm [shape: bf16[16,32], index: 4, kind: output, shape index: {}]
  %s5 = sld [smem:[#allocation0]]
  $region53: #{tpu_custom_call.1} parent=0
    _
  %s7 = ssub.s32 1, %s5
  %s8 = scalar_select 0, %s7, %s5
  %9 = sst [smem:[#allocation3]] %s0
  $region1: #{tpu_custom_call.1} parent=0
    #allocation4 [shape = 'u8[8192]{0}', space=vmem, size = 0x2000, scoped, tag = 'input window, operand 1']
    #allocation5 [shape = 's32[2]{0}', space=sflag, size = 0x8, scoped, tag = 'scoped memory for tpu_custom_call.1']
    #allocation6 [shape = 's32[2]{0}', space=sflag, size = 0x8, scoped, tag = 'scoped memory for tpu_custom_call.1']
    #allocation7 [shape = 'u8[8192]{0}', space=vmem, size = 0x2000, scoped, tag = 'input window, operand 2, single buffered']
    #allocation8 [shape = 's32[1]{0}', space=sflag, size = 0x4, scoped, tag = 'scoped memory for tpu_custom_call.1']
    #allocation9 [shape = 'u8[4096]{0}', space=vmem, size = 0x1000, scoped, tag = 'output window, operand 0']
    %10 = vsyncpa [#allocation5], 0
    %s11 = scalar_lea.sflag [#allocation5], 1
    %12 = vsyncpa %s11, 0
    %13 = vsyncpa [#allocation8], 0
    %14 = vsyncpa [#allocation6], 0
    %s15 = scalar_lea.sflag [#allocation6], 1
    %16 = vsyncpa %s15, 0
    loop: start=0, step=1, limit=4
    $region2: #{tpu_custom_call.1} parent=1 // loop_pre_header
      _
    $region3: #{tpu_custom_call.1} parent=1 // loop_header
      %s18 = sphi 0, %s22
      %p19 = scmp.ge.s32.totalorder %s18, 4
      %s25 = sphi 0, %s37
      %s26 = sphi 0, %s33
      %s27 = sphi 0, %s25
      %s28 = sphi 0, %s26
      %s29 = sphi 0, %s27
      %s30 = sphi 0, %s28
      %s40 = sphi 0, %s42
      %s43 = sphi 0, %s40
      %s44 = sphi 0, %s43
      %s60 = sphi 0, %s44
      %s66 = sphi 0, %s68
      %s69 = sphi 0, %s66
      %s70 = sphi 0, %s69
      %s86 = sphi 0, %s70
      %s92 = sphi 0, %s94
      %s95 = sphi 0, %s92
      %s96 = sphi 0, %s95
      %s112 = sphi 0, %s96
      %s120 = sphi 0, %s122
      %s123 = sphi 0, %s120
      %s124 = sphi 0, %s123
      %s140 = sphi 0, %s124
    $region4: #{tpu_custom_call.1} parent=1 // loop_header_branch
      %21 = sbr.rel (%p19) target = $region8
    $region5: #{tpu_custom_call.1} parent=1 // loop_body
      %s23 = ssub.s32 %s18, 1
      %s24 = ssub.s32 %s18, 2
      %s31 = sadd.s32 1, %s26
      %p32 = scmp.ge.s32.totalorder %s31, 2
      %s33 = scalar_select %p32, 0, %s31
      %s34 = sadd.s32 1, %s25
      %s35 = scalar_select %p32, %s34, %s25
      %p36 = scmp.ge.s32.totalorder %s35, 1
      %s37 = scalar_select %p36, 0, %s35
      %s38 = ssub.s32 %s26, %s33
      %p39 = scmp.eq.s32.totalorder %s38, 0
      %s41 = sadd.s32 %s40, 1
      %s42 = scalar_select %p39, %s40, %s41
      %p45 = pneg %p39
      %p46 = scmp.eq.s32.totalorder %s18, 1
      %p47 = por %p45, %p46
      %p48 = scmp.ne.s32.totalorder %s40, %s43
      %p49 = scmp.eq.s32.totalorder %s18, 0
      %p50 = por %p48, %p49
      %p51 = scmp.ne.s32.totalorder %s40, %s43
      %p52 = scmp.eq.s32.totalorder %s23, 1
      %p53 = por %p51, %p52
      %p54 = scmp.ne.s32.totalorder %s43, %s44
      %p55 = scmp.eq.s32.totalorder %s23, 0
      %p56 = por %p54, %p55
      %p57 = scmp.ne.s32.totalorder %s43, %s44
      %p58 = scmp.eq.s32.totalorder %s24, 1
      %p59 = por %p57, %p58
      %p61 = scmp.ne.s32.totalorder %s44, %s60
      %p62 = scmp.eq.s32.totalorder %s24, 0
      %p63 = por %p61, %p62
      %s64 = ssub.s32 %s25, %s37
      %p65 = scmp.eq.s32.totalorder %s64, 0
      %s67 = sadd.s32 %s66, 1
      %s68 = scalar_select %p65, %s66, %s67
      %p71 = pneg %p65
      %p72 = scmp.eq.s32.totalorder %s18, 1
      %p73 = por %p71, %p72
      %p74 = scmp.ne.s32.totalorder %s66, %s69
      %p75 = scmp.eq.s32.totalorder %s18, 0
      %p76 = por %p74, %p75
      %p77 = scmp.ne.s32.totalorder %s66, %s69
      %p78 = scmp.eq.s32.totalorder %s23, 1
      %p79 = por %p77, %p78
      %p80 = scmp.ne.s32.totalorder %s69, %s70
      %p81 = scmp.eq.s32.totalorder %s23, 0
      %p82 = por %p80, %p81
      %p83 = scmp.ne.s32.totalorder %s69, %s70
      %p84 = scmp.eq.s32.totalorder %s24, 1
      %p85 = por %p83, %p84
      %p87 = scmp.ne.s32.totalorder %s70, %s86
      %p88 = scmp.eq.s32.totalorder %s24, 0
      %p89 = por %p87, %p88
      %s90 = ssub.s32 %s25, %s37
      %p91 = scmp.eq.s32.totalorder %s90, 0
      %s93 = sadd.s32 %s92, 1
      %s94 = scalar_select %p91, %s92, %s93
      %p97 = pneg %p91
      %p98 = scmp.eq.s32.totalorder %s18, 1
      %p99 = por %p97, %p98
      %p100 = scmp.ne.s32.totalorder %s92, %s95
      %p101 = scmp.eq.s32.totalorder %s18, 0
      %p102 = por %p100, %p101
      %p103 = scmp.ne.s32.totalorder %s92, %s95
      %p104 = scmp.eq.s32.totalorder %s23, 1
      %p105 = por %p103, %p104
      %p106 = scmp.ne.s32.totalorder %s95, %s96
      %p107 = scmp.eq.s32.totalorder %s23, 0
      %p108 = por %p106, %p107
      %p109 = scmp.ne.s32.totalorder %s95, %s96
      %p110 = scmp.eq.s32.totalorder %s24, 1
      %p111 = por %p109, %p110
      %p113 = scmp.ne.s32.totalorder %s96, %s112
      %p114 = scmp.eq.s32.totalorder %s24, 0
      %p115 = por %p113, %p114
      %s116 = ssub.s32 %s26, %s33
      %s117 = ssub.s32 %s25, %s37
      %s118 = sor.u32 %s116, %s117
      %p119 = scmp.eq.s32.totalorder %s118, 0
      %s121 = sadd.s32 %s120, 1
      %s122 = scalar_select %p119, %s120, %s121
      %p125 = pneg %p119
      %p126 = scmp.eq.s32.totalorder %s18, 1
      %p127 = por %p125, %p126
      %p128 = scmp.ne.s32.totalorder %s120, %s123
      %p129 = scmp.eq.s32.totalorder %s18, 0
      %p130 = por %p128, %p129
      %p131 = scmp.ne.s32.totalorder %s120, %s123
      %p132 = scmp.eq.s32.totalorder %s23, 1
      %p133 = por %p131, %p132
      %p134 = scmp.ne.s32.totalorder %s123, %s124
      %p135 = scmp.eq.s32.totalorder %s23, 0
      %p136 = por %p134, %p135
      %p137 = scmp.ne.s32.totalorder %s123, %s124
      %p138 = scmp.eq.s32.totalorder %s24, 1
      %p139 = por %p137, %p138
      %p141 = scmp.ne.s32.totalorder %s124, %s140
      %p142 = scmp.eq.s32.totalorder %s24, 0
      %p143 = por %p141, %p142
      %p144 = scmp.le.s32.totalorder 1, %s18
      %p145 = scmp.lt.s32.totalorder %s18, 3
      %p146 = pnand %p144, %p145
      %p147 = pneg %p146
      // Predicated region
      $region9: #{tpu_custom_call.1} parent=5 // pred_check
        _
      $region10: #{tpu_custom_call.1} parent=5 // pred_check_branch
        %149 = sbr.rel (%p146) target = $region12
      $region11: #{tpu_custom_call.1} parent=5 // pred_region
        %s150 = ssub.s32 %s18, 1
        // Predicated region
        $region13: #{tpu_custom_call.1} parent=11 // pred_check
          %p151 = pneg %p82
        $region14: #{tpu_custom_call.1} parent=11 // pred_check_branch
          %153 = sbr.rel (%p151) target = $region16
        $region15: #{tpu_custom_call.1} parent=11 // pred_region
          %155 = vsyncadd [#allocation8], 0
          %s156 = smul.addr %s27, 4
          %s157 = scalar_lea.hbm %s2, %s156
          %s158 = sshll.u32 %s157, 4
          %s159 = int_to_ptr.hbm [resolvable:$true] %s158
          %s160 = sshll.u32 [#allocation7], 4
          %s161 = int_to_ptr.vmem [resolvable:$true] %s160
          %166 = dma.hbm_to_vmem [thread:$0]  %s159, 256, %s161, [#allocation8], 64, 64, 4
        $region16: #{tpu_custom_call.1} parent=11 // pred_fallthru
          _
        // Predicated region
        $region17: #{tpu_custom_call.1} parent=11 // pred_check
          %p167 = pneg %p108
        $region18: #{tpu_custom_call.1} parent=11 // pred_check_branch
          %169 = sbr.rel (%p167) target = $region20
        $region19: #{tpu_custom_call.1} parent=11 // pred_region
          %p170 = scmp.lt.s32.totalorder %s27, 0
          %s171 = scalar_select %p170, %s27, 0
          %s172 = scalar_lea.vmem %s3, %s171
        $region20: #{tpu_custom_call.1} parent=11 // pred_fallthru
          _
      $region12: #{tpu_custom_call.1} parent=5 // pred_fallthru
        _
      %p173 = scmp.lt.s32.totalorder %s18, 2
      // Predicated region
      $region21: #{tpu_custom_call.1} parent=5 // pred_check
        %p174 = pneg %p173
      $region22: #{tpu_custom_call.1} parent=5 // pred_check_branch
        %176 = sbr.rel (%p174) target = $region24
      $region23: #{tpu_custom_call.1} parent=5 // pred_region
        // Predicated region
        $region25: #{tpu_custom_call.1} parent=23 // pred_check
          %p177 = pneg %p50
        $region26: #{tpu_custom_call.1} parent=23 // pred_check_branch
          %179 = sbr.rel (%p177) target = $region28
        $region27: #{tpu_custom_call.1} parent=23 // pred_region
          %s180 = sand.u32 %s40, 1
          %s181 = scalar_lea.sflag [#allocation5], %s180
          %s182 = sand.u32 %s40, 1
          %s183 = smul.addr %s182, 8
          %s184 = scalar_lea.vmem [#allocation4], %s183
          %186 = vsyncadd %s181, 0
          %s187 = smul.addr %s26, 8
          %s188 = scalar_lea.hbm %s1, %s187
          %s190 = sshll.u32 %s188, 4
          %s191 = int_to_ptr.hbm [resolvable:$true] %s190
          %s192 = sshll.u32 %s184, 4
          %s193 = int_to_ptr.vmem [resolvable:$true] %s192
          %195 = dma.hbm_to_vmem [thread:$0]  %s191, 128, %s193, %s181
        $region28: #{tpu_custom_call.1} parent=23 // pred_fallthru
          _
      $region24: #{tpu_custom_call.1} parent=5 // pred_fallthru
        _
      %p196 = scmp.le.s32.totalorder 1, %s18
      %p197 = scmp.lt.s32.totalorder %s18, 3
      %p198 = pnand %p196, %p197
      %p199 = pneg %p198
      // Predicated region
      $region29: #{tpu_custom_call.1} parent=5 // pred_check
        _
      $region30: #{tpu_custom_call.1} parent=5 // pred_check_branch
        %201 = sbr.rel (%p198) target = $region32
      $region31: #{tpu_custom_call.1} parent=5 // pred_region
        %s202 = ssub.s32 %s18, 1
        %s203 = sand.u32 %s43, 1
        %s204 = scalar_lea.sflag [#allocation5], %s203
        %s205 = sand.u32 %s43, 1
        %s206 = smul.addr %s205, 8
        %s207 = scalar_lea.vmem [#allocation4], %s206
        // Predicated region
        $region33: #{tpu_custom_call.1} parent=31 // pred_check
          %p208 = pneg %p56
        $region34: #{tpu_custom_call.1} parent=31 // pred_check_branch
          %210 = sbr.rel (%p208) target = $region36
        $region35: #{tpu_custom_call.1} parent=31 // pred_region
          %212 = dma.done %s204, 128
        $region36: #{tpu_custom_call.1} parent=31 // pred_fallthru
          _
        // Predicated region
        $region37: #{tpu_custom_call.1} parent=31 // pred_check
          %p213 = pneg %p82
        $region38: #{tpu_custom_call.1} parent=31 // pred_check_branch
          %215 = sbr.rel (%p213) target = $region40
        $region39: #{tpu_custom_call.1} parent=31 // pred_region
          %217 = dma.done [#allocation8], 256
        $region40: #{tpu_custom_call.1} parent=31 // pred_fallthru
          _
        %s218 = sand.u32 %s43, 1
        %s219 = scalar_lea.sflag [#allocation5], %s218
        %s220 = sand.u32 %s43, 1
        %s221 = smul.addr %s220, 8
        %s222 = scalar_lea.vmem [#allocation4], %s221
        %p223 = pneg %p56
        %p224 = pneg %p53
        %p225 = pneg %p82
        %p226 = pneg %p79
        %p227 = scmp.lt.s32.totalorder %s27, 0
        %s228 = scalar_select %p227, %s27, 0
        %s229 = scalar_lea.vmem %s3, %s228
        %p230 = pneg %p108
        %p231 = pneg %p105
        %p232 = pneg %p136
        %p233 = pneg %p133
        %s234 = sand.u32 %s123, 1
        %s235 = scalar_lea.sflag [#allocation6], %s234
        %s236 = sand.u32 %s123, 1
        %s237 = smul.addr %s236, 4
        %s238 = scalar_lea.vmem [#allocation9], %s237
        %p239 = scmp.lt.s32.totalorder %s27, 0
        %s240 = scalar_select %p239, %s27, 0
        %s241 = scalar_lea.vmem %s3, %s240
        %v243 = vld [vmem:[%s207] sm:$0xff]
        %vm244 = vcmask 261120
        %v245 = vsel %vm244, %v243, 0.0
        %246 = vadd.xlane.f32.xlu0 %v245
        %v247 = vpop.xlane.xlu0 %246
        %v248 = vrcp.pop 32.0
        %v249 = vmul.f32 32.0, %v248
        %v250 = vsub.f32 1.0, %v249
        %v251 = vmul.f32 %v248, %v250
        %v252 = vadd.f32 %v248, %v251
        %vm253 = vweird.f32 %v248
        %v254 = vsel %vm253, %v248, %v252
        %v255 = vmul.f32 %v247, %v254
        %v256 = vsub.f32 %v243, %v255
        %v257 = vmul.f32 %v256, %v256
        %v258 = vsel %vm244, %v257, 0.0
        %259 = vadd.xlane.f32.xlu0 %v258
        %v260 = vpop.xlane.xlu0 %259
        %v261 = vmul.f32 %v260, 0.032258064
        %v262 = vrsqrt.pop %v261
        %v263 = vmul.f32 %v262, %v261
        %v264 = vmul.f32 %v263, %v262
        %v265 = vmul.f32 0.5, %v264
        %v266 = vsub.f32 1.5, %v265
        %v267 = vmul.f32 %v262, %v266
        %v268 = vmul.f32 %v261, %v267
        %vm269 = vcmp.eq.f32.partialorder %v261, inf
        %v270 = vsel %vm269, %v261, %v268
        %vm271 = vcmp.eq.f32.partialorder %v261, 0.0
        %v272 = vand.u32 %v261, 2147483648
        %v273 = vsel %vm271, %v272, %v270
        %v274 = vadd.f32 %v273, 1e-06
        %v275 = vrcp.pop %v274
        %v276 = vmul.f32 %v274, %v275
        %v277 = vsub.f32 1.0, %v276
        %v278 = vmul.f32 %v275, %v277
        %v279 = vadd.f32 %v275, %v278
        %vm280 = vweird.f32 %v274
        %vm281 = vweird.f32 %v275
        %vm282 = vmor %vm280, %vm281
        %v283 = vsel %vm282, %v275, %v279
        %v284 = vand.u32 2147483647, %v274
        %vm285 = vcmp.eq.f32.partialorder %v284, 8.507059e+37
        %v286 = vand.u32 %v274, 2147483648
        %v287 = vor.u32 1.1754944e-38, %v286
        %v288 = vsel %vm285, %v287, %v283
        %v289 = vmul.f32 %v256, %v288
        %v290 = vpack.c.bf16 %v289, %v289
        %v291 = vld [vmem:[#allocation7] sm:$0xf]
        %v292 = vld [vmem:[#allocation7 + $0x4] sm:$0xf]
        %v293 = vld [vmem:[#allocation7 + $0x8] sm:$0xf]
        %v294 = vld [vmem:[#allocation7 + $0xc] sm:$0xf]
        %v295 = vld [vmem:[%s241] sm:$0x1]
        %v297 = vperm.slane %v295, 0
        %v303 = vunpack.c.l.b16 %v291
        %v304 = vunpack.c.l.b16 %v292
        %v305 = vunpack.c.l.b16 %v293
        %v306 = vunpack.c.l.b16 %v294
        %v307 = vpack.c.b16 %v304, %v303
        %v308 = vpack.c.b16 %v306, %v305
        %v312 = vsel %vm244, %v290, 0
        %314 = vmatpush.bf16.msra.mxu0 0
        %315 = vmatpush.bf16.msra.mxu0 0
        %316 = vmatpush.bf16.msra.mxu0 0
        %317 = vmatpush.bf16.msra.mxu0 0
        %318 = vmatpush.bf16.msra.mxu0 0
        %319 = vmatpush.bf16.msra.mxu0 0
        %320 = vmatpush.bf16.msra.mxu0 %v308
        %321 = vmatpush.bf16.msra.mxu0 %v307
        %322 = vmatmul.bf16.gmra.mxu0 %v312
        %v323 = vpop.f32.mrf.mxu0
        %v324 = vadd.f32 %v297, %v323
        %v325 = vpop.f32.mrf.mxu0
        %326 = vdwg.mxu0
        %v327 = vadd.f32 %v243, %v324
        %v328 = vpack.c.bf16 %v327, %v327
        %vm329 = vcmask 257024
        %330 = vst.msk [vmem:[%s238] sm:$0xf] %vm329, %v328
        %s331 = sand.u32 %s123, 1
        %s332 = scalar_lea.sflag [#allocation6], %s331
        %s333 = sand.u32 %s123, 1
        %s334 = smul.addr %s333, 4
        %s335 = scalar_lea.vmem [#allocation9], %s334
        // Predicated region
        $region41: #{tpu_custom_call.1} parent=31 // pred_check
          %p336 = pneg %p133
        $region42: #{tpu_custom_call.1} parent=31 // pred_check_branch
          %338 = sbr.rel (%p336) target = $region44
        $region43: #{tpu_custom_call.1} parent=31 // pred_region
          %340 = vsyncadd %s332, 0
          %s341 = sadd.s32 %s27, %s28
          %s342 = smul.addr %s341, 4
          %s343 = scalar_lea.hbm %s4, %s342
          %s345 = sshll.u32 %s335, 4
          %s346 = int_to_ptr.vmem [resolvable:$true] %s345
          %s347 = sshll.u32 %s343, 4
          %s348 = int_to_ptr.hbm [resolvable:$true] %s347
          %350 = dma.vmem_to_hbm [thread:$0]  %s346, 64, %s348, %s332
        $region44: #{tpu_custom_call.1} parent=31 // pred_fallthru
          _
      $region32: #{tpu_custom_call.1} parent=5 // pred_fallthru
        _
      %p351 = scmp.le.s32.totalorder 2, %s18
      // Predicated region
      $region45: #{tpu_custom_call.1} parent=5 // pred_check
        %p352 = pneg %p351
      $region46: #{tpu_custom_call.1} parent=5 // pred_check_branch
        %354 = sbr.rel (%p352) target = $region48
      $region47: #{tpu_custom_call.1} parent=5 // pred_region
        %s355 = ssub.s32 %s18, 2
        // Predicated region
        $region49: #{tpu_custom_call.1} parent=47 // pred_check
          %p356 = pneg %p139
        $region50: #{tpu_custom_call.1} parent=47 // pred_check_branch
          %358 = sbr.rel (%p356) target = $region52
        $region51: #{tpu_custom_call.1} parent=47 // pred_region
          %s359 = sand.u32 %s124, 1
          %s360 = scalar_lea.sflag [#allocation6], %s359
          %s361 = sand.u32 %s124, 1
          %s362 = smul.addr %s361, 4
          %s363 = scalar_lea.vmem [#allocation9], %s362
          %365 = dma.done %s360, 64
        $region52: #{tpu_custom_call.1} parent=47 // pred_fallthru
          _
      $region48: #{tpu_custom_call.1} parent=5 // pred_fallthru
        _
    $region6: #{tpu_custom_call.1} parent=1 // loop_footer
      %s22 = sadd.s32 1, %s18
    $region7: #{tpu_custom_call.1} parent=1 // loop_footer_branch
      %17 = sbr.rel target = $region3
    $region8: #{tpu_custom_call.1} parent=1 // loop_exit
      _
    %366 = vsyncpa [#allocation5], 1
    %s367 = scalar_lea.sflag [#allocation5], 1
    %368 = vsyncpa %s367, 1
    %369 = vsyncpa [#allocation8], 1
    %370 = vsyncpa [#allocation6], 1
    %s371 = scalar_lea.sflag [#allocation6], 1
    %372 = vsyncpa %s371, 1

</llo_original>
